<compile_context>
chip_gen: v5e
topology: v5e:2x2
jax: 0.10.0
libtpu: 0.0.40
codegen_flags: <defaults>
</compile_context>

<pallas_src>
import math

import jax
import jax.numpy as jnp
from jax.experimental import pallas as pl
from jax.experimental.pallas import tpu as pltpu


def pair_generation_kernel(x_ref, a_ref, o_ref):
    # x_ref: (bb, N, F) block of inputs for `bb` batch elements.
    # a_ref: (F, F) fused weight A = W1^T @ W2 (same block every step ->
    #        resident in VMEM, never transposed in-kernel).
    # o_ref: (bb, N, N) pair-score output block.
    bb = x_ref.shape[0]
    a = a_ref[...]
    for i in range(bb):  # small, static unroll over the batch block
        xi = x_ref[i]                                              # (N, F)
        # Linear stage: x @ (W1^T W2)   -- one MXU matmul per element.
        h = jnp.dot(xi, a, preferred_element_type=jnp.float32)     # (N, F)
        h = h.astype(xi.dtype)
        # Pair scores: h @ xi^T, expressed as a contraction over the feature
        # axis of both operands (no explicit transpose materialized).
        out = jax.lax.dot_general(
            h, xi,
            dimension_numbers=(((1,), (1,)), ((), ())),
            preferred_element_type=jnp.float32)                    # (N, N)
        o_ref[i] = out.astype(o_ref.dtype)


def pair_generation(x, w1, w2, *, batch_block=None):
    """out[b] = (x[b] @ w1.T) @ (x[b] @ w2.T).T  for each batch element b."""
    B, N, F = x.shape
    assert w1.shape == (F, F) and w2.shape == (F, F)

    # Algebraic fusion, paid once outside the kernel (F^3 flops amortized
    # over the whole batch): h1 @ h2^T == x @ (W1^T @ W2) @ x^T.
    a = jnp.dot(w1.T, w2, preferred_element_type=jnp.float32).astype(x.dtype)

    itemsize = jnp.dtype(x.dtype).itemsize
    if batch_block is None:
        # Largest divisor of B whose (double-buffered) blocks stay well under
        # the scoped-VMEM default on every chip generation.
        budget = 8 * 1024 * 1024
        batch_block = 1
        for bb_try in range(B, 0, -1):
            if B % bb_try != 0:
                continue
            need = 2 * bb_try * (N * F + N * N) * itemsize + 2 * F * F * itemsize
            if need <= budget:
                batch_block = bb_try
                break
    bb = batch_block
    assert B % bb == 0, "batch_block must divide the batch size"

    flops = 2 * B * (N * F * F + N * N * F)
    bytes_accessed = (B * N * F + F * F + B * N * N) * itemsize

    return pl.pallas_call(
        pair_generation_kernel,
        out_shape=jax.ShapeDtypeStruct((B, N, N), x.dtype),
        grid_spec=pltpu.PrefetchScalarGridSpec(
            num_scalar_prefetch=0,
            grid=(B // bb,),
            in_specs=[
                pl.BlockSpec((bb, N, F), lambda b: (b, 0, 0)),
                pl.BlockSpec((F, F), lambda b: (0, 0)),
            ],
            out_specs=pl.BlockSpec((bb, N, N), lambda b: (b, 0, 0)),
        ),
        compiler_params=pltpu.CompilerParams(
            dimension_semantics=("parallel",),
        ),
        cost_estimate=pl.CostEstimate(
            flops=flops, transcendentals=0, bytes_accessed=bytes_accessed),
    )(x, a)


def kaiming_uniform(key, shape, a=math.sqrt(5), dtype=jnp.float32):
    # Mirrors torch.nn.init.kaiming_uniform_ for a 2-D weight (fan_in = shape[1]).
    fan_in = shape[1]
    gain = math.sqrt(2.0 / (1.0 + a * a))
    bound = gain * math.sqrt(3.0 / fan_in)
    return jax.random.uniform(key, shape, dtype=dtype, minval=-bound, maxval=bound)


if __name__ == "__main__":
    B, N, FEATURES = 2, 8, 32

    key = jax.random.PRNGKey(0)
    k_x, k_w1, k_w2 = jax.random.split(key, 3)

    x = jax.random.normal(k_x, (B, N, FEATURES), dtype=jnp.float32)
    # Deterministic in-script parameter init (bias=False, the module default).
    w1 = kaiming_uniform(k_w1, (FEATURES, FEATURES))
    w2 = kaiming_uniform(k_w2, (FEATURES, FEATURES))

    out = pair_generation(x, w1, w2)
    out = jax.block_until_ready(out)

    # Pure-JAX reference of the original (unfused) two-stage forward.
    h1_ref = jnp.einsum("bnf,gf->bng", x, w1)
    h2_ref = jnp.einsum("bnf,gf->bng", x, w2)
    out_ref = jnp.einsum("bng,bmg->bnm", h1_ref, h2_ref)

    assert out.shape == (B, N, N)
    assert jnp.allclose(out, out_ref, atol=1e-4, rtol=1e-4)

    print("KERNEL_OK")
</pallas_src>

<mosaic_0001>
module attributes {stable_mosaic.version = 11 : i64} {
  func.func @pair_generation_kernel(%arg0: i32, %arg1: memref<2x8x32xf32, #tpu.memory_space<vmem>>, %arg2: memref<32x32xf32, #tpu.memory_space<vmem>>, %arg3: memref<2x8x8xf32, #tpu.memory_space<vmem>>) attributes {dimension_semantics = [#tpu.dimension_semantics<parallel>], iteration_bounds = array<i64: 1>, scalar_prefetch = 0 : i64, scratch_operands = 0 : i64, tpu.core_type = #tpu.core_type<tc>, window_params = [{transform_indices = @transform_0, window_bounds = array<i64: 2, 8, 32>}, {pipeline_mode = #tpu.pipeline_mode<synchronous>, transform_indices = @transform_1, window_bounds = array<i64: 32, 32>}, {transform_indices = @transform_2, window_bounds = array<i64: 2, 8, 8>}]} {
    %c0 = arith.constant 0 : index
    %c0_0 = arith.constant 0 : index
    %0 = vector.load %arg2[%c0, %c0_0] : memref<32x32xf32, #tpu.memory_space<vmem>>, vector<32x32xf32>
    %c0_1 = arith.constant 0 : index
    %c0_2 = arith.constant 0 : index
    %c0_3 = arith.constant 0 : index
    %1 = vector.load %arg1[%c0_1, %c0_2, %c0_3] : memref<2x8x32xf32, #tpu.memory_space<vmem>>, vector<1x8x32xf32>
    %2 = vector.shape_cast %1 : vector<1x8x32xf32> to vector<8x32xf32>
    %cst = arith.constant dense<0.000000e+00> : vector<8x32xf32>
    %3 = tpu.matmul %2, %0, %cst {dimension_numbers = #tpu.dot_dimension_numbers<[1], [0], [0], [1], [0, 0, 1, 1], [], []>} : vector<8x32xf32>, vector<32x32xf32>, vector<8x32xf32> -> vector<8x32xf32>
    %cst_4 = arith.constant dense<0.000000e+00> : vector<8x8xf32>
    %4 = tpu.matmul %3, %2, %cst_4 {dimension_numbers = #tpu.dot_dimension_numbers<[1], [1], [0], [0], [0, 0, 1, 0], [], []>} : vector<8x32xf32>, vector<8x32xf32>, vector<8x8xf32> -> vector<8x8xf32>
    %c0_5 = arith.constant 0 : index
    %c0_6 = arith.constant 0 : index
    %c0_7 = arith.constant 0 : index
    %5 = vector.load %arg3[%c0_5, %c0_6, %c0_7] : memref<2x8x8xf32, #tpu.memory_space<vmem>>, vector<1x8x8xf32>
    %6 = vector.shape_cast %5 : vector<1x8x8xf32> to vector<8x8xf32>
    %7 = vector.shape_cast %4 : vector<8x8xf32> to vector<1x8x8xf32>
    tpu.vector_store %arg3[%c0_5, %c0_6, %c0_7], %7 {strides = array<i32>} : memref<2x8x8xf32, #tpu.memory_space<vmem>>, vector<1x8x8xf32>,
    %c1 = arith.constant 1 : index
    %c0_8 = arith.constant 0 : index
    %c0_9 = arith.constant 0 : index
    %8 = vector.load %arg1[%c1, %c0_8, %c0_9] : memref<2x8x32xf32, #tpu.memory_space<vmem>>, vector<1x8x32xf32>
    %9 = vector.shape_cast %8 : vector<1x8x32xf32> to vector<8x32xf32>
    %cst_10 = arith.constant dense<0.000000e+00> : vector<8x32xf32>
    %10 = tpu.matmul %9, %0, %cst_10 {dimension_numbers = #tpu.dot_dimension_numbers<[1], [0], [0], [1], [0, 0, 1, 1], [], []>} : vector<8x32xf32>, vector<32x32xf32>, vector<8x32xf32> -> vector<8x32xf32>
    %cst_11 = arith.constant dense<0.000000e+00> : vector<8x8xf32>
    %11 = tpu.matmul %10, %9, %cst_11 {dimension_numbers = #tpu.dot_dimension_numbers<[1], [1], [0], [0], [0, 0, 1, 0], [], []>} : vector<8x32xf32>, vector<8x32xf32>, vector<8x8xf32> -> vector<8x8xf32>
    %c1_12 = arith.constant 1 : index
    %c0_13 = arith.constant 0 : index
    %c0_14 = arith.constant 0 : index
    %12 = vector.load %arg3[%c1_12, %c0_13, %c0_14] : memref<2x8x8xf32, #tpu.memory_space<vmem>>, vector<1x8x8xf32>
    %13 = vector.shape_cast %12 : vector<1x8x8xf32> to vector<8x8xf32>
    %14 = vector.shape_cast %11 : vector<8x8xf32> to vector<1x8x8xf32>
    tpu.vector_store %arg3[%c1_12, %c0_13, %c0_14], %14 {strides = array<i32>} : memref<2x8x8xf32, #tpu.memory_space<vmem>>, vector<1x8x8xf32>,
    return
  }
  func.func @transform_0(%arg0: i32) -> (i32, i32, i32) {
    %c0_i32 = arith.constant 0 : i32
    %c0_i32_0 = arith.constant 0 : i32
    %c0_i32_1 = arith.constant 0 : i32
    return %arg0, %c0_i32, %c0_i32_0 : i32, i32, i32
  }
  func.func @transform_1(%arg0: i32) -> (i32, i32) {
    %c0_i32 = arith.constant 0 : i32
    %c0_i32_0 = arith.constant 0 : i32
    %c0_i32_1 = arith.constant 0 : i32
    return %c0_i32, %c0_i32_0 : i32, i32
  }
  func.func @transform_2(%arg0: i32) -> (i32, i32, i32) {
    %c0_i32 = arith.constant 0 : i32
    %c0_i32_0 = arith.constant 0 : i32
    %c0_i32_1 = arith.constant 0 : i32
    return %arg0, %c0_i32, %c0_i32_0 : i32, i32, i32
  }
}

</mosaic_0001>

<llo_original>
// kernel: tpu_custom_call.1
$region0: #{tpu_custom_call.1}
  #allocation0 [shape = 'u32[]', space=smem, size = 0x4, offset = 0x4, fixed_abs, tag = 'smem constant byte address 0x4 - core index']
  #allocation1 [shape = 'u32[72,128]{1,0:T(1,128)}', space=vmem, size = 0x9000, scoped, tag = 'internal scratch']
  %s0 = inlined_call_operand.hbm [shape: f32[2,8,32], index: 0, kind: input, shape index: {}]
  %s1 = inlined_call_operand.hbm [shape: f32[32,32], index: 1, kind: input, shape index: {}]
  %s2 = inlined_call_operand.hbm [shape: f32[2,8,8], index: 2, kind: output, shape index: {}]
  %s3 = sld [smem:[#allocation0]]
  $region26: #{tpu_custom_call.1} parent=0
    _
  %s5 = ssub.s32 1, %s3
  %s6 = scalar_select 0, %s5, %s3
  $region1: #{tpu_custom_call.1} parent=0
    #allocation2 [shape = 'u8[8192]{0}', space=vmem, size = 0x2000, scoped, tag = 'input window, operand 0, single buffered']
    #allocation3 [shape = 's32[1]{0}', space=sflag, size = 0x4, scoped, tag = 'scoped memory for tpu_custom_call.1']
    #allocation4 [shape = 's32[1]{0}', space=sflag, size = 0x4, scoped, tag = 'scoped memory for tpu_custom_call.1']
    #allocation5 [shape = 'u8[16384]{0}', space=vmem, size = 0x4000, scoped, tag = 'input window, operand 1, single buffered']
    #allocation6 [shape = 's32[1]{0}', space=sflag, size = 0x4, scoped, tag = 'scoped memory for tpu_custom_call.1']
    #allocation7 [shape = 'u8[8192]{0}', space=vmem, size = 0x2000, scoped, tag = 'output window, operand 0, single buffered']
    %7 = vsyncpa [#allocation3], 0
    %8 = vsyncpa [#allocation6], 0
    %9 = vsyncpa [#allocation4], 0
    // Predicated region
    $region2: #{tpu_custom_call.1} parent=1 // pred_check
      _
    $region3: #{tpu_custom_call.1} parent=1 // pred_check_branch
      %11 = sbr.rel (0) target = $region5
    $region4: #{tpu_custom_call.1} parent=1 // pred_region
      %13 = vsyncadd [#allocation3], 0
      %s14 = sshll.u32 %s0, 4
      %s15 = int_to_ptr.hbm [resolvable:$true] %s14
      %s16 = sshll.u32 [#allocation2], 4
      %s17 = int_to_ptr.vmem [resolvable:$true] %s16
      %22 = dma.hbm_to_vmem [thread:$0]  %s15, 256, %s17, [#allocation3], 128, 128, 8
    $region5: #{tpu_custom_call.1} parent=1 // pred_fallthru
      _
    // Predicated region
    $region6: #{tpu_custom_call.1} parent=1 // pred_check
      _
    $region7: #{tpu_custom_call.1} parent=1 // pred_check_branch
      %24 = sbr.rel (0) target = $region9
    $region8: #{tpu_custom_call.1} parent=1 // pred_region
      %26 = vsyncadd [#allocation6], 0
      %s27 = sshll.u32 %s1, 4
      %s28 = int_to_ptr.hbm [resolvable:$true] %s27
      %s29 = sshll.u32 [#allocation5], 4
      %s30 = int_to_ptr.vmem [resolvable:$true] %s29
      %35 = dma.hbm_to_vmem [thread:$0]  %s28, 512, %s30, [#allocation6], 128, 128, 8
    $region9: #{tpu_custom_call.1} parent=1 // pred_fallthru
      _
    // Predicated region
    $region10: #{tpu_custom_call.1} parent=1 // pred_check
      _
    $region11: #{tpu_custom_call.1} parent=1 // pred_check_branch
      %37 = sbr.rel (0) target = $region13
    $region12: #{tpu_custom_call.1} parent=1 // pred_region
      %39 = dma.done [#allocation3], 256
    $region13: #{tpu_custom_call.1} parent=1 // pred_fallthru
      _
    // Predicated region
    $region14: #{tpu_custom_call.1} parent=1 // pred_check
      _
    $region15: #{tpu_custom_call.1} parent=1 // pred_check_branch
      %41 = sbr.rel (0) target = $region17
    $region16: #{tpu_custom_call.1} parent=1 // pred_region
      %43 = dma.done [#allocation6], 512
    $region17: #{tpu_custom_call.1} parent=1 // pred_fallthru
      _
    %v44 = vld [vmem:[#allocation5] sm:$0xff]
    %v45 = vld [vmem:[#allocation5 + $0x8] sm:$0xff]
    %v46 = vld [vmem:[#allocation5 + $0x10] sm:$0xff]
    %v47 = vld [vmem:[#allocation5 + $0x18] sm:$0xff]
    %v48 = vld [vmem:[#allocation2] sm:$0xff]
    %vm49 = vcmask 261120
    %v51 = vsel %vm49, %v48, 0
    %53 = vmatpush.msra.mxu0 0.0
    %54 = vmatpush.msra.mxu0 0.0
    %55 = vmatpush.msra.mxu0 0.0
    %56 = vmatpush.msra.mxu0 0.0
    %57 = vmatpush.msra.mxu0 0.0
    %58 = vmatpush.msra.mxu0 0.0
    %59 = vmatpush.msra.mxu0 0.0
    %60 = vmatpush.msra.mxu0 0.0
    %61 = vmatpush.msra.mxu0 0.0
    %62 = vmatpush.msra.mxu0 0.0
    %63 = vmatpush.msra.mxu0 0.0
    %64 = vmatpush.msra.mxu0 0.0
    %65 = vmatpush.msra.mxu0 %v47
    %66 = vmatpush.msra.mxu0 %v46
    %67 = vmatpush.msra.mxu0 %v45
    %68 = vmatpush.msra.mxu0 %v44
    %69 = vmatmul.f32.gmra.mxu0 %v51
    %v70 = vpop.f32.mrf.mxu0
    %v71 = vadd.f32 0.0, %v70
    %72 = vdwg.mxu0
    %v74 = vsel %vm49, %v71, 0
    %76 = vmatpush.xpose.msra.mxu0 0.0
    %77 = vmatpush.xpose.msra.mxu0 0.0
    %78 = vmatpush.xpose.msra.mxu0 0.0
    %79 = vmatpush.xpose.msra.mxu0 0.0
    %80 = vmatpush.xpose.msra.mxu0 0.0
    %81 = vmatpush.xpose.msra.mxu0 0.0
    %82 = vmatpush.xpose.msra.mxu0 0.0
    %83 = vmatpush.xpose.msra.mxu0 0.0
    %84 = vmatpush.xpose.msra.mxu0 0.0
    %85 = vmatpush.xpose.msra.mxu0 0.0
    %86 = vmatpush.xpose.msra.mxu0 0.0
    %87 = vmatpush.xpose.msra.mxu0 0.0
    %88 = vmatpush.xpose.msra.mxu0 0.0
    %89 = vmatpush.xpose.msra.mxu0 0.0
    %90 = vmatpush.xpose.msra.mxu0 0.0
    %91 = vmatpush.xpose.msra.mxu0 %v51
    %92 = vmatmul.f32.gmra.mxu0 %v74
    %v93 = vpop.f32.mrf.mxu0
    %v94 = vadd.f32 0.0, %v93
    %95 = vdwg.mxu0
    %vm96 = vcmask 64512
    %97 = vst.msk [vmem:[#allocation7] sm:$0xff] %vm96, %v94
    %s98 = scalar_lea.vmem [#allocation2], 8
    %v99 = vld [vmem:[%s98] sm:$0xff]
    %v101 = vsel %vm49, %v99, 0
    %103 = vmatpush.msra.mxu0 0.0
    %104 = vmatpush.msra.mxu0 0.0
    %105 = vmatpush.msra.mxu0 0.0
    %106 = vmatpush.msra.mxu0 0.0
    %107 = vmatpush.msra.mxu0 0.0
    %108 = vmatpush.msra.mxu0 0.0
    %109 = vmatpush.msra.mxu0 0.0
    %110 = vmatpush.msra.mxu0 0.0
    %111 = vmatpush.msra.mxu0 0.0
    %112 = vmatpush.msra.mxu0 0.0
    %113 = vmatpush.msra.mxu0 0.0
    %114 = vmatpush.msra.mxu0 0.0
    %115 = vmatpush.msra.mxu0 %v47
    %116 = vmatpush.msra.mxu0 %v46
    %117 = vmatpush.msra.mxu0 %v45
    %118 = vmatpush.msra.mxu0 %v44
    %119 = vmatmul.f32.gmra.mxu0 %v101
    %v120 = vpop.f32.mrf.mxu0
    %v121 = vadd.f32 0.0, %v120
    %122 = vdwg.mxu0
    %v124 = vsel %vm49, %v121, 0
    %126 = vmatpush.xpose.msra.mxu0 0.0
    %127 = vmatpush.xpose.msra.mxu0 0.0
    %128 = vmatpush.xpose.msra.mxu0 0.0
    %129 = vmatpush.xpose.msra.mxu0 0.0
    %130 = vmatpush.xpose.msra.mxu0 0.0
    %131 = vmatpush.xpose.msra.mxu0 0.0
    %132 = vmatpush.xpose.msra.mxu0 0.0
    %133 = vmatpush.xpose.msra.mxu0 0.0
    %134 = vmatpush.xpose.msra.mxu0 0.0
    %135 = vmatpush.xpose.msra.mxu0 0.0
    %136 = vmatpush.xpose.msra.mxu0 0.0
    %137 = vmatpush.xpose.msra.mxu0 0.0
    %138 = vmatpush.xpose.msra.mxu0 0.0
    %139 = vmatpush.xpose.msra.mxu0 0.0
    %140 = vmatpush.xpose.msra.mxu0 0.0
    %141 = vmatpush.xpose.msra.mxu0 %v101
    %142 = vmatmul.f32.gmra.mxu0 %v124
    %v143 = vpop.f32.mrf.mxu0
    %v144 = vadd.f32 0.0, %v143
    %145 = vdwg.mxu0
    %s146 = scalar_lea.vmem [#allocation7], 8
    %147 = vst.msk [vmem:[%s146] sm:$0xff] %vm96, %v144
    // Predicated region
    $region18: #{tpu_custom_call.1} parent=1 // pred_check
      _
    $region19: #{tpu_custom_call.1} parent=1 // pred_check_branch
      %149 = sbr.rel (0) target = $region21
    $region20: #{tpu_custom_call.1} parent=1 // pred_region
      %151 = vsyncadd [#allocation4], 0
      %s152 = sshll.u32 [#allocation7], 4
      %s153 = int_to_ptr.vmem [resolvable:$true] %s152
      %s154 = sshll.u32 %s2, 4
      %s155 = int_to_ptr.hbm [resolvable:$true] %s154
      %160 = dma.vmem_to_hbm [thread:$0]  %s153, 256, %s155, [#allocation4], 128, 128, 8
    $region21: #{tpu_custom_call.1} parent=1 // pred_fallthru
      _
    // Predicated region
    $region22: #{tpu_custom_call.1} parent=1 // pred_check
      _
    $region23: #{tpu_custom_call.1} parent=1 // pred_check_branch
      %162 = sbr.rel (0) target = $region25
    $region24: #{tpu_custom_call.1} parent=1 // pred_region
      %164 = dma.done [#allocation4], 256
    $region25: #{tpu_custom_call.1} parent=1 // pred_fallthru
      _
    %165 = vsyncpa [#allocation3], 1
    %166 = vsyncpa [#allocation6], 1
    %167 = vsyncpa [#allocation4], 1

</llo_original>
